<compile_context>
chip_gen: v7x
topology: tpu7x:2x2x1
jax: 0.10.0
libtpu: 0.0.40
codegen_flags: <defaults>
</compile_context>

<pallas_src>
import jax
import jax.numpy as jnp
from jax.experimental import pallas as pl
from jax.experimental.pallas import tpu as pltpu


def _round_up(n, m):
    return ((n + m - 1) // m) * m


def _sigmoid(z):
    # One EUP op (tanh) + cheap VALU mul/add; mathematically exact sigmoid.
    return 0.5 * jnp.tanh(0.5 * z) + 0.5


def _make_mlp_kernel(in_dim, hidden, out_dim):
    # Flat parameter slab layout (row-major PyTorch weights):
    #   w1[j, k] -> p[j*in_dim + k]
    #   b1[j]    -> p[hidden*in_dim + j]
    #   w2[m, j] -> p[hidden*in_dim + hidden + m*hidden + j]
    #   b2[m]    -> p[hidden*in_dim + hidden + out_dim*hidden + m]
    w1_off = 0
    b1_off = hidden * in_dim
    w2_off = b1_off + hidden
    b2_off = w2_off + out_dim * hidden

    def kernel(p_ref, x_ref, out_ref):
        # p_ref:   SMEM f32[in*h + h + h*out + out]   (scalar params)
        # x_ref:   VMEM f32[in_dim, TB]                (batch on lanes)
        # out_ref: VMEM f32[out_dim, TB]
        x = x_ref[...]

        # fc1 + sigmoid: h_j = sigmoid(sum_k w1[j,k] * x[k,:] + b1[j])
        # K=2 / N=3 contraction: unrolled scalar-splat VPU multiply-adds
        # (an MXU pass would be >99% padding at this shape).
        hs = []
        for j in range(hidden):
            acc = x[0:1, :] * p_ref[w1_off + j * in_dim + 0]
            for k in range(1, in_dim):
                acc = acc + x[k:k + 1, :] * p_ref[w1_off + j * in_dim + k]
            acc = acc + p_ref[b1_off + j]
            hs.append(_sigmoid(acc))

        # fc2 + sigmoid: out_m = sigmoid(sum_j w2[m,j] * h_j + b2[m])
        for m in range(out_dim):
            acc = hs[0] * p_ref[w2_off + m * hidden + 0]
            for j in range(1, hidden):
                acc = acc + hs[j] * p_ref[w2_off + m * hidden + j]
            acc = acc + p_ref[b2_off + m]
            out_ref[m:m + 1, :] = _sigmoid(acc)

    return kernel


def simple_nn_forward(x, w1, b1, w2, b2):
    """Forward pass with PyTorch-layout params.

    x:  (B, in)
    w1: (hidden, in),  b1: (hidden,)   -- nn.Linear(in, hidden)
    w2: (out, hidden), b2: (out,)      -- nn.Linear(hidden, out)
    Returns (B, out).
    """
    B, in_dim = x.shape
    hidden = w1.shape[0]
    out_dim = w2.shape[0]

    # One flat f32 parameter slab -> SMEM (13 scalars for the XOR net).
    p = jnp.concatenate(
        [w1.reshape(-1), b1.reshape(-1), w2.reshape(-1), b2.reshape(-1)]
    ).astype(jnp.float32)

    # Feature-major / batch-on-lanes layout for lane-dense loads and stores.
    xt = x.astype(jnp.float32).T                      # (in_dim, B)

    # Single big lane tile: whole batch up to 64K lanes (per-row footprint is
    # ~12 B, so even TB=65536 is <1 MiB double-buffered). Larger batches get a
    # "parallel" cdiv grid (shards across both TensorCores on v7x); the ragged
    # final tile is masked by Pallas on writeback -- no wrapper jnp.pad.
    TB = min(_round_up(B, 128), 65536)
    grid = (pl.cdiv(B, TB),)

    kernel = _make_mlp_kernel(in_dim, hidden, out_dim)

    out_t = pl.pallas_call(
        kernel,
        out_shape=jax.ShapeDtypeStruct((out_dim, B), jnp.float32),
        grid=grid,
        in_specs=[
            # Scalar params: whole slab resident in SMEM (1-D, so no SMEM
            # [ceil(R/8)*8, ceil(C/128)*128] padding blowup).
            pl.BlockSpec(memory_space=pltpu.MemorySpace.SMEM),
            # Activations: batch tiled along lanes.
            pl.BlockSpec((in_dim, TB), lambda i: (0, i)),
        ],
        out_specs=pl.BlockSpec((out_dim, TB), lambda i: (0, i)),
        compiler_params=pltpu.CompilerParams(
            dimension_semantics=("parallel",)),
    )(p, xt)

    return out_t.T                                    # (B, out_dim)


def _reference(x, w1, b1, w2, b2):
    h = jax.nn.sigmoid(x @ w1.T + b1)
    return jax.nn.sigmoid(h @ w2.T + b2)


if __name__ == "__main__":
    input_nodes, hidden_nodes, output_nodes = 2, 3, 1
    batch = 4  # XOR truth-table sized batch

    key = jax.random.PRNGKey(0)
    k_w1, k_b1, k_w2, k_b2 = jax.random.split(key, 4)

    # Deterministic "trained-like" parameters (PyTorch shapes: W1 (3,2), W2 (1,3)).
    w1 = jax.random.normal(k_w1, (hidden_nodes, input_nodes), jnp.float32) * 0.5
    b1 = jax.random.normal(k_b1, (hidden_nodes,), jnp.float32) * 0.5
    w2 = jax.random.normal(k_w2, (output_nodes, hidden_nodes), jnp.float32) * 0.5
    b2 = jax.random.normal(k_b2, (output_nodes,), jnp.float32) * 0.5

    # Inputs: the XOR truth table.
    x = jnp.array([[0.0, 0.0], [0.0, 1.0], [1.0, 0.0], [1.0, 1.0]], jnp.float32)

    out = jax.block_until_ready(simple_nn_forward(x, w1, b1, w2, b2))

    ref = _reference(x, w1, b1, w2, b2)
    assert out.shape == (batch, output_nodes), out.shape
    # tanh-based sigmoid is exact, so tight tolerance is fine.
    assert jnp.allclose(out, ref, atol=1e-5, rtol=1e-5), (out, ref)

    print("KERNEL_OK")
</pallas_src>

<mosaic_0001>
module attributes {stable_mosaic.version = 11 : i64} {
  func.func @kernel(%arg0: i32, %arg1: memref<13xf32, #tpu.memory_space<smem>>, %arg2: memref<2x128xf32, #tpu.memory_space<vmem>>, %arg3: memref<1x128xf32, #tpu.memory_space<vmem>>) attributes {dimension_semantics = [#tpu.dimension_semantics<parallel>], iteration_bounds = array<i64: 1>, scalar_prefetch = 0 : i64, scratch_operands = 0 : i64, tpu.core_type = #tpu.core_type<tc>, window_params = [{transform_indices = @transform_0, window_bounds = array<i64: 13>}, {transform_indices = @transform_1, window_bounds = array<i64: 2, 128>}, {transform_indices = @transform_2, window_bounds = array<i64: 1, 128>}]} {
    %c0 = arith.constant 0 : index
    %c0_0 = arith.constant 0 : index
    %0 = vector.load %arg2[%c0, %c0_0] : memref<2x128xf32, #tpu.memory_space<vmem>>, vector<2x128xf32>
    %1 = vector.extract_strided_slice %0 {offsets = [0, 0], sizes = [1, 128], strides = [1, 1]} : vector<2x128xf32> to vector<1x128xf32>
    %c0_1 = arith.constant 0 : index
    %2 = memref.load %arg1[%c0_1] : memref<13xf32, #tpu.memory_space<smem>>
    %3 = vector.broadcast %2 : f32 to vector<1x128xf32>
    %4 = arith.mulf %1, %3 : vector<1x128xf32>
    %5 = vector.extract_strided_slice %0 {offsets = [1, 0], sizes = [1, 128], strides = [1, 1]} : vector<2x128xf32> to vector<1x128xf32>
    %c1 = arith.constant 1 : index
    %6 = memref.load %arg1[%c1] : memref<13xf32, #tpu.memory_space<smem>>
    %7 = vector.broadcast %6 : f32 to vector<1x128xf32>
    %8 = arith.mulf %5, %7 : vector<1x128xf32>
    %9 = arith.addf %4, %8 : vector<1x128xf32>
    %c6 = arith.constant 6 : index
    %10 = memref.load %arg1[%c6] : memref<13xf32, #tpu.memory_space<smem>>
    %11 = vector.broadcast %10 : f32 to vector<1x128xf32>
    %12 = arith.addf %9, %11 : vector<1x128xf32>
    %cst = arith.constant 5.000000e-01 : f32
    %13 = vector.broadcast %cst : f32 to vector<1x128xf32>
    %14 = arith.mulf %13, %12 : vector<1x128xf32>
    %15 = math.tanh %14 : vector<1x128xf32>
    %cst_2 = arith.constant 5.000000e-01 : f32
    %16 = vector.broadcast %cst_2 : f32 to vector<1x128xf32>
    %17 = arith.mulf %16, %15 : vector<1x128xf32>
    %cst_3 = arith.constant 5.000000e-01 : f32
    %18 = vector.broadcast %cst_3 : f32 to vector<1x128xf32>
    %19 = arith.addf %17, %18 : vector<1x128xf32>
    %20 = vector.extract_strided_slice %0 {offsets = [0, 0], sizes = [1, 128], strides = [1, 1]} : vector<2x128xf32> to vector<1x128xf32>
    %c2 = arith.constant 2 : index
    %21 = memref.load %arg1[%c2] : memref<13xf32, #tpu.memory_space<smem>>
    %22 = vector.broadcast %21 : f32 to vector<1x128xf32>
    %23 = arith.mulf %20, %22 : vector<1x128xf32>
    %24 = vector.extract_strided_slice %0 {offsets = [1, 0], sizes = [1, 128], strides = [1, 1]} : vector<2x128xf32> to vector<1x128xf32>
    %c3 = arith.constant 3 : index
    %25 = memref.load %arg1[%c3] : memref<13xf32, #tpu.memory_space<smem>>
    %26 = vector.broadcast %25 : f32 to vector<1x128xf32>
    %27 = arith.mulf %24, %26 : vector<1x128xf32>
    %28 = arith.addf %23, %27 : vector<1x128xf32>
    %c7 = arith.constant 7 : index
    %29 = memref.load %arg1[%c7] : memref<13xf32, #tpu.memory_space<smem>>
    %30 = vector.broadcast %29 : f32 to vector<1x128xf32>
    %31 = arith.addf %28, %30 : vector<1x128xf32>
    %cst_4 = arith.constant 5.000000e-01 : f32
    %32 = vector.broadcast %cst_4 : f32 to vector<1x128xf32>
    %33 = arith.mulf %32, %31 : vector<1x128xf32>
    %34 = math.tanh %33 : vector<1x128xf32>
    %cst_5 = arith.constant 5.000000e-01 : f32
    %35 = vector.broadcast %cst_5 : f32 to vector<1x128xf32>
    %36 = arith.mulf %35, %34 : vector<1x128xf32>
    %cst_6 = arith.constant 5.000000e-01 : f32
    %37 = vector.broadcast %cst_6 : f32 to vector<1x128xf32>
    %38 = arith.addf %36, %37 : vector<1x128xf32>
    %39 = vector.extract_strided_slice %0 {offsets = [0, 0], sizes = [1, 128], strides = [1, 1]} : vector<2x128xf32> to vector<1x128xf32>
    %c4 = arith.constant 4 : index
    %40 = memref.load %arg1[%c4] : memref<13xf32, #tpu.memory_space<smem>>
    %41 = vector.broadcast %40 : f32 to vector<1x128xf32>
    %42 = arith.mulf %39, %41 : vector<1x128xf32>
    %43 = vector.extract_strided_slice %0 {offsets = [1, 0], sizes = [1, 128], strides = [1, 1]} : vector<2x128xf32> to vector<1x128xf32>
    %c5 = arith.constant 5 : index
    %44 = memref.load %arg1[%c5] : memref<13xf32, #tpu.memory_space<smem>>
    %45 = vector.broadcast %44 : f32 to vector<1x128xf32>
    %46 = arith.mulf %43, %45 : vector<1x128xf32>
    %47 = arith.addf %42, %46 : vector<1x128xf32>
    %c8 = arith.constant 8 : index
    %48 = memref.load %arg1[%c8] : memref<13xf32, #tpu.memory_space<smem>>
    %49 = vector.broadcast %48 : f32 to vector<1x128xf32>
    %50 = arith.addf %47, %49 : vector<1x128xf32>
    %cst_7 = arith.constant 5.000000e-01 : f32
    %51 = vector.broadcast %cst_7 : f32 to vector<1x128xf32>
    %52 = arith.mulf %51, %50 : vector<1x128xf32>
    %53 = math.tanh %52 : vector<1x128xf32>
    %cst_8 = arith.constant 5.000000e-01 : f32
    %54 = vector.broadcast %cst_8 : f32 to vector<1x128xf32>
    %55 = arith.mulf %54, %53 : vector<1x128xf32>
    %cst_9 = arith.constant 5.000000e-01 : f32
    %56 = vector.broadcast %cst_9 : f32 to vector<1x128xf32>
    %57 = arith.addf %55, %56 : vector<1x128xf32>
    %c9 = arith.constant 9 : index
    %58 = memref.load %arg1[%c9] : memref<13xf32, #tpu.memory_space<smem>>
    %59 = vector.broadcast %58 : f32 to vector<1x128xf32>
    %60 = arith.mulf %19, %59 : vector<1x128xf32>
    %c10 = arith.constant 10 : index
    %61 = memref.load %arg1[%c10] : memref<13xf32, #tpu.memory_space<smem>>
    %62 = vector.broadcast %61 : f32 to vector<1x128xf32>
    %63 = arith.mulf %38, %62 : vector<1x128xf32>
    %64 = arith.addf %60, %63 : vector<1x128xf32>
    %c11 = arith.constant 11 : index
    %65 = memref.load %arg1[%c11] : memref<13xf32, #tpu.memory_space<smem>>
    %66 = vector.broadcast %65 : f32 to vector<1x128xf32>
    %67 = arith.mulf %57, %66 : vector<1x128xf32>
    %68 = arith.addf %64, %67 : vector<1x128xf32>
    %c12 = arith.constant 12 : index
    %69 = memref.load %arg1[%c12] : memref<13xf32, #tpu.memory_space<smem>>
    %70 = vector.broadcast %69 : f32 to vector<1x128xf32>
    %71 = arith.addf %68, %70 : vector<1x128xf32>
    %cst_10 = arith.constant 5.000000e-01 : f32
    %72 = vector.broadcast %cst_10 : f32 to vector<1x128xf32>
    %73 = arith.mulf %72, %71 : vector<1x128xf32>
    %74 = math.tanh %73 : vector<1x128xf32>
    %cst_11 = arith.constant 5.000000e-01 : f32
    %75 = vector.broadcast %cst_11 : f32 to vector<1x128xf32>
    %76 = arith.mulf %75, %74 : vector<1x128xf32>
    %cst_12 = arith.constant 5.000000e-01 : f32
    %77 = vector.broadcast %cst_12 : f32 to vector<1x128xf32>
    %78 = arith.addf %76, %77 : vector<1x128xf32>
    %c0_13 = arith.constant 0 : index
    %c0_14 = arith.constant 0 : index
    %79 = vector.load %arg3[%c0_13, %c0_14] : memref<1x128xf32, #tpu.memory_space<vmem>>, vector<1x128xf32>
    tpu.vector_store %arg3[%c0_13, %c0_14], %78 {strides = array<i32>} : memref<1x128xf32, #tpu.memory_space<vmem>>, vector<1x128xf32>,
    return
  }
  func.func @transform_0(%arg0: i32) -> i32 {
    %c0_i32 = arith.constant 0 : i32
    %c0_i32_0 = arith.constant 0 : i32
    return %c0_i32 : i32
  }
  func.func @transform_1(%arg0: i32) -> (i32, i32) {
    %c0_i32 = arith.constant 0 : i32
    %c0_i32_0 = arith.constant 0 : i32
    return %c0_i32, %arg0 : i32, i32
  }
  func.func @transform_2(%arg0: i32) -> (i32, i32) {
    %c0_i32 = arith.constant 0 : i32
    %c0_i32_0 = arith.constant 0 : i32
    return %c0_i32, %arg0 : i32, i32
  }
}

</mosaic_0001>

<llo_original>
// kernel: tpu_custom_call.1
$region0: #{tpu_custom_call.1}
  #allocation0 [shape = 'u32[]', space=smem, size = 0x4, offset = 0x4, fixed_abs, tag = 'smem constant byte address 0x4 - core index']
  #allocation1 [shape = 'u32[144,128]{1,0:T(1,128)}', space=vmem, size = 0x12000, scoped, tag = 'internal scratch']
  %s0 = inlined_call_operand.hbm [shape: f32[13], index: 0, kind: input, shape index: {}]
  %s1 = inlined_call_operand.vmem [shape: f32[2,4], index: 1, kind: input, shape index: {}]
  %s2 = inlined_call_operand.hbm [shape: f32[1,4], index: 2, kind: output, shape index: {}]
  %s3 = sld [smem:[#allocation0]]
  $region22: #{tpu_custom_call.1} parent=0
    _
  %s5 = ssub.s32 1, %s3
  %s6 = scalar_select 0, %s5, %s3
  $region1: #{tpu_custom_call.1} parent=0
    #allocation2 [shape = 'u8[512]{0}', space=smem, size = 0x200, scoped, tag = 'input window, operand 0, single buffered']
    #allocation3 [shape = 's32[1]{0}', space=sflag, size = 0x4, scoped, tag = 'scoped memory for tpu_custom_call.1']
    #allocation4 [shape = 's32[1]{0}', space=sflag, size = 0x4, scoped, tag = 'scoped memory for tpu_custom_call.1']
    #allocation5 [shape = 'u8[512]{0}', space=vmem, size = 0x400, scoped, tag = 'output window, operand 0, single buffered']
    %7 = vsyncpa [#allocation4], 0
    %8 = vsyncpa [#allocation3], 0
    // Predicated region
    $region2: #{tpu_custom_call.1} parent=1 // pred_check
      _
    $region3: #{tpu_custom_call.1} parent=1 // pred_check_branch
      %10 = sbr.rel (0) target = $region5
    $region4: #{tpu_custom_call.1} parent=1 // pred_region
      %s12 = ssub.s32 16, 16
      %13 = vsyncadd [#allocation4], %s12
      %16 = dma.hbm_to_smem %s0, 16, [#allocation2], [#allocation4]
    $region5: #{tpu_custom_call.1} parent=1 // pred_fallthru
      _
    // Predicated region
    $region6: #{tpu_custom_call.1} parent=1 // pred_check
      _
    $region7: #{tpu_custom_call.1} parent=1 // pred_check_branch
      %18 = sbr.rel (0) target = $region9
    $region8: #{tpu_custom_call.1} parent=1 // pred_region
      _
    $region9: #{tpu_custom_call.1} parent=1 // pred_fallthru
      _
    // Predicated region
    $region10: #{tpu_custom_call.1} parent=1 // pred_check
      _
    $region11: #{tpu_custom_call.1} parent=1 // pred_check_branch
      %20 = sbr.rel (0) target = $region13
    $region12: #{tpu_custom_call.1} parent=1 // pred_region
      %21 = dma.done [#allocation4], 16
    $region13: #{tpu_custom_call.1} parent=1 // pred_fallthru
      _
    %22 = sfence
    %v23 = vld [vmem:[%s1] sm:$0x3]
    %s24 = sld [smem:[#allocation2]]
    %v25 = vstv %s24
    %v26 = vmul.f32 %v23, %v25
    %s27 = sld [smem:[#allocation2 + $0x1]]
    %v28 = vstv %s27
    %v29 = vmul.f32 %v23, %v28
    %v31 = vrot.slane %v29, 1
    %v33 = vadd.f32 %v26, %v31
    %s34 = sld [smem:[#allocation2 + $0x6]]
    %v35 = vstv %s34
    %v36 = vadd.f32 %v33, %v35
    %v37 = vmul.f32 %v36, 0.5
    %v38 = vtanh.pop %v37
    %v39 = vmul.f32 %v38, 0.5
    %v40 = vadd.f32 %v39, 0.5
    %s41 = sld [smem:[#allocation2 + $0x2]]
    %v42 = vstv %s41
    %v43 = vmul.f32 %v23, %v42
    %s44 = sld [smem:[#allocation2 + $0x3]]
    %v45 = vstv %s44
    %v46 = vmul.f32 %v23, %v45
    %v48 = vrot.slane %v46, 1
    %v50 = vadd.f32 %v43, %v48
    %s51 = sld [smem:[#allocation2 + $0x7]]
    %v52 = vstv %s51
    %v53 = vadd.f32 %v50, %v52
    %v54 = vmul.f32 %v53, 0.5
    %v55 = vtanh.pop %v54
    %v56 = vmul.f32 %v55, 0.5
    %v57 = vadd.f32 %v56, 0.5
    %s58 = sld [smem:[#allocation2 + $0x4]]
    %v59 = vstv %s58
    %v60 = vmul.f32 %v23, %v59
    %s61 = sld [smem:[#allocation2 + $0x5]]
    %v62 = vstv %s61
    %v63 = vmul.f32 %v23, %v62
    %v65 = vrot.slane %v63, 1
    %v67 = vadd.f32 %v60, %v65
    %s68 = sld [smem:[#allocation2 + $0x8]]
    %v69 = vstv %s68
    %v70 = vadd.f32 %v67, %v69
    %v71 = vmul.f32 %v70, 0.5
    %v72 = vtanh.pop %v71
    %v73 = vmul.f32 %v72, 0.5
    %v74 = vadd.f32 %v73, 0.5
    %s75 = sld [smem:[#allocation2 + $0x9]]
    %v76 = vstv %s75
    %v77 = vmul.f32 %v40, %v76
    %s78 = sld [smem:[#allocation2 + $0xa]]
    %v79 = vstv %s78
    %v80 = vmul.f32 %v57, %v79
    %v81 = vadd.f32 %v77, %v80
    %s82 = sld [smem:[#allocation2 + $0xb]]
    %v83 = vstv %s82
    %v84 = vmul.f32 %v74, %v83
    %v85 = vadd.f32 %v81, %v84
    %s86 = sld [smem:[#allocation2 + $0xc]]
    %v87 = vstv %s86
    %v88 = vadd.f32 %v85, %v87
    %v89 = vmul.f32 %v88, 0.5
    %v90 = vtanh.pop %v89
    %v91 = vmul.f32 %v90, 0.5
    %v92 = vadd.f32 %v91, 0.5
    %93 = vst [vmem:[#allocation5] sm:$0x1] %v92
    // Predicated region
    $region14: #{tpu_custom_call.1} parent=1 // pred_check
      _
    $region15: #{tpu_custom_call.1} parent=1 // pred_check_branch
      %95 = sbr.rel (0) target = $region17
    $region16: #{tpu_custom_call.1} parent=1 // pred_region
      %s97 = ssub.s32 16, 16
      %98 = vsyncadd [#allocation3], %s97
      %s100 = sshll.u32 [#allocation5], 4
      %s101 = int_to_ptr.vmem [resolvable:$true] %s100
      %103 = dma.vmem_to_hbm [thread:$0]  %s101, 16, %s2, [#allocation3]
    $region17: #{tpu_custom_call.1} parent=1 // pred_fallthru
      _
    // Predicated region
    $region18: #{tpu_custom_call.1} parent=1 // pred_check
      _
    $region19: #{tpu_custom_call.1} parent=1 // pred_check_branch
      %105 = sbr.rel (0) target = $region21
    $region20: #{tpu_custom_call.1} parent=1 // pred_region
      %106 = dma.done [#allocation3], 16
    $region21: #{tpu_custom_call.1} parent=1 // pred_fallthru
      _
    %107 = vsyncpa [#allocation3], 1
    %108 = vsyncpa [#allocation4], 1

</llo_original>
